<compile_context>
chip_gen: v7x
topology: tpu7x:2x2x1
jax: 0.10.0
libtpu: 0.0.40
codegen_flags: <defaults>
</compile_context>

<pallas_src>
import jax
import jax.numpy as jnp
from jax.experimental import pallas as pl
from jax.experimental.pallas import tpu as pltpu


def _round_up(v, m):
    return (v + m - 1) // m * m


def _make_down_kernel(N, Cin_p, Cout_p, H2, W2):
    Hp = H2 + 2                        # one zero pad row above/below each image
    Wp = _round_up(W2 + 2, 8)          # pad cols, rounded so dy tap offsets are 8-aligned
    M = Wp + 8                         # zero margin lanes (>= Wp + 1, multiple of 8)
    Rp = N * Hp * Wp                   # pixels of the padded pooled image
    Rtot = Rp + 2 * M
    inv_cnt = 1.0 / float(N * H2 * W2)  # BN count: valid pixels per channel
    EPS = 1e-5
    offs = tuple(dy * Wp + dx for dy in (-1, 0, 1) for dx in (-1, 0, 1))

    def conv_bn_relu(taps, mask, w_ref, g_ref, b_ref):
        # im2col: 9 lane-shifted tap views stacked along the contraction axis
        # (each piece is Cpad sublanes -> tile-aligned concat), then a single MXU
        # matmul with K = 9*Cpad and f32 accumulation.
        cols = jnp.concatenate(taps, axis=0)                      # (9*Cp, Rp) bf16
        acc = jnp.dot(w_ref[...], cols,
                      preferred_element_type=jnp.float32)         # (Cout_p, Rp) f32
        # training-mode BatchNorm over the valid pixels only (single masked pass,
        # accumulation kept in f32 as required for the sum/sumsq form).
        am = acc * mask
        s1 = jnp.sum(am, axis=1, keepdims=True)
        s2 = jnp.sum(am * am, axis=1, keepdims=True)
        mean = s1 * inv_cnt
        var = jnp.maximum(s2 * inv_cnt - mean * mean, 0.0)
        y = (acc - mean) * jax.lax.rsqrt(var + EPS) * g_ref[...] + b_ref[...]
        return jnp.maximum(y, 0.0)

    def kernel(xw_ref, mask_ref, w1_ref, g1_ref, b1_ref,
               w2_ref, g2_ref, b2_ref, out_ref, h1p_ref):
        # ---- MaxPool2d(2): elementwise max of the four window slabs (VPU) -----
        pooled = jnp.maximum(jnp.maximum(xw_ref[0], xw_ref[1]),
                             jnp.maximum(xw_ref[2], xw_ref[3]))   # (Cin_p, Rtot) bf16
        mask = mask_ref[...]                                      # (1, Rp) f32

        # ---- conv1 -> BN -> ReLU ----------------------------------------------
        taps1 = [pooled[:, M + o:M + o + Rp] for o in offs]
        h1 = conv_bn_relu(taps1, mask, w1_ref, g1_ref, b1_ref) * mask  # re-zero pads

        # ---- hand h1 to conv2 in the same padded+margin layout -----------------
        h1p_ref[:, 0:M] = jnp.zeros((h1p_ref.shape[0], M), jnp.bfloat16)
        h1p_ref[:, M + Rp:Rtot] = jnp.zeros((h1p_ref.shape[0], M), jnp.bfloat16)
        h1p_ref[:, M:M + Rp] = h1.astype(jnp.bfloat16)

        # ---- conv2 -> BN -> ReLU (pad pixels are sliced off by the wrapper) ----
        taps2 = [h1p_ref[:, M + o:M + o + Rp] for o in offs]
        out_ref[...] = conv_bn_relu(taps2, mask, w2_ref, g2_ref, b2_ref)

    return kernel, Hp, Wp, M, Rp, Rtot


def down_forward(x_nchw, w1_oihw, g1, b1, w2_oihw, g2, b2):
    """Forward pass of Down (maxpool2 + double conv-bn-relu). NCHW in / NCHW out."""
    N, Cin, H, W = x_nchw.shape
    Cout = w1_oihw.shape[0]
    H2, W2 = H // 2, W // 2
    Cin_p, Cout_p = _round_up(Cin, 16), _round_up(Cout, 16)   # bf16 sublane tile
    kernel, Hp, Wp, M, Rp, Rtot = _make_down_kernel(N, Cin_p, Cout_p, H2, W2)

    # ---- glue: window-expanded input, already in the padded+margin pooled layout
    x = x_nchw[:, :, :2 * H2, :2 * W2].astype(jnp.float32)
    xwin = (x.reshape(N, Cin, H2, 2, W2, 2)
             .transpose(3, 5, 1, 0, 2, 4)                  # (2, 2, Cin, N, H2, W2)
             .reshape(4, Cin, N, H2, W2))
    xw = jnp.zeros((4, Cin_p, N, Hp, Wp), jnp.float32)
    xw = xw.at[:, :Cin, :, 1:1 + H2, 1:1 + W2].set(xwin)
    xw = jnp.pad(xw.reshape(4, Cin_p, Rp), ((0, 0), (0, 0), (M, M)))
    xw = xw.astype(jnp.bfloat16)                           # (4, Cin_p, Rtot)

    # validity mask over padded pixels (1.0 at real output positions)
    mask = (jnp.zeros((N, Hp, Wp), jnp.float32)
            .at[:, 1:1 + H2, 1:1 + W2].set(1.0)
            .reshape(1, Rp))

    # conv weights as (Cout_p, 9*Cin_p); contraction index = (kh*3 + kw)*Cin_p + cin
    def pack_w(w, ci, ci_p, co, co_p):
        wt = jnp.zeros((co_p, 3, 3, ci_p), jnp.float32)
        wt = wt.at[:co, :, :, :ci].set(w.transpose(0, 2, 3, 1).astype(jnp.float32))
        return wt.reshape(co_p, 9 * ci_p).astype(jnp.bfloat16)

    def pack_vec(v, co, co_p, fill):
        out = jnp.full((co_p, 1), fill, jnp.float32)
        return out.at[:co, 0].set(v.astype(jnp.float32))

    w1t = pack_w(w1_oihw, Cin, Cin_p, Cout, Cout_p)
    w2t = pack_w(w2_oihw, Cout, Cout_p, Cout, Cout_p)
    g1c, b1c = pack_vec(g1, Cout, Cout_p, 1.0), pack_vec(b1, Cout, Cout_p, 0.0)
    g2c, b2c = pack_vec(g2, Cout, Cout_p, 1.0), pack_vec(b2, Cout, Cout_p, 0.0)

    # Explicit scoped-VMEM budget sized to the slab footprint (< v7x's 64 MiB).
    slab_bytes = (4 * Cin_p * Rtot * 2 + Cout_p * Rtot * 2 + Rp * 4
                  + 9 * (Cin_p + Cout_p) * Rp * 2 + 6 * Cout_p * Rp * 4)
    vmem_limit = int(min(max(4 * slab_bytes, 16 * 1024 * 1024), 56 * 1024 * 1024))

    vmem = pl.BlockSpec(memory_space=pltpu.MemorySpace.VMEM)
    out_t = pl.pallas_call(
        kernel,
        out_shape=jax.ShapeDtypeStruct((Cout_p, Rp), jnp.float32),
        in_specs=[vmem] * 8,
        out_specs=vmem,
        scratch_shapes=[pltpu.VMEM((Cout_p, Rtot), jnp.bfloat16)],
        compiler_params=pltpu.CompilerParams(vmem_limit_bytes=vmem_limit),
    )(xw, mask, w1t, g1c, b1c, w2t, g2c, b2c)

    # ---- glue: drop channel/pixel padding, back to NCHW
    y = out_t.reshape(Cout_p, N, Hp, Wp)[:Cout, :, 1:1 + H2, 1:1 + W2]
    return y.transpose(1, 0, 2, 3)


def _reference(x, w1, g1, b1, w2, g2, b2):
    N, C, H, W = x.shape
    p = x.reshape(N, C, H // 2, 2, W // 2, 2).max(axis=(3, 5))

    def block(h, w, g, b):
        y = jax.lax.conv_general_dilated(h, w, (1, 1), ((1, 1), (1, 1)),
                                         dimension_numbers=("NCHW", "OIHW", "NCHW"))
        mean = y.mean(axis=(0, 2, 3), keepdims=True)
        var = ((y - mean) ** 2).mean(axis=(0, 2, 3), keepdims=True)
        yhat = (y - mean) * jax.lax.rsqrt(var + 1e-5)
        return jnp.maximum(yhat * g.reshape(1, -1, 1, 1) + b.reshape(1, -1, 1, 1), 0.0)

    return block(block(p, w1, g1, b1), w2, g2, b2)


if __name__ == "__main__":
    key = jax.random.PRNGKey(0)
    k0, k1, k2, k3, k4 = jax.random.split(key, 5)
    N, Cin, Cout, H, W = 2, 4, 8, 16, 16

    x = jax.random.normal(k0, (N, Cin, H, W), jnp.float32)
    w1 = jax.random.normal(k1, (Cout, Cin, 3, 3), jnp.float32) * 0.1
    w2 = jax.random.normal(k2, (Cout, Cout, 3, 3), jnp.float32) * 0.1
    g1 = 1.0 + 0.1 * jax.random.normal(k3, (Cout,), jnp.float32)
    b1 = 0.1 * jax.random.normal(k4, (Cout,), jnp.float32)
    g2 = jnp.ones((Cout,), jnp.float32)
    b2 = jnp.zeros((Cout,), jnp.float32)

    out = jax.jit(down_forward)(x, w1, g1, b1, w2, g2, b2)
    out = jax.block_until_ready(out)

    ref = _reference(x, w1, g1, b1, w2, g2, b2)
    assert out.shape == (N, Cout, H // 2, W // 2), out.shape
    # Tolerance sized for bf16 matmul operands (f32 accumulation / BN math).
    if not jnp.allclose(out, ref, atol=2e-2, rtol=2e-2):
        max_err = float(jnp.max(jnp.abs(out - ref)))
        raise AssertionError(f"mismatch vs reference, max abs err = {max_err}")
    print("KERNEL_OK")
</pallas_src>

<mosaic_0001>
module attributes {stable_mosaic.version = 11 : i64} {
  func.func @kernel(%arg0: memref<4x16x368xbf16, #tpu.memory_space<vmem>>, %arg1: memref<1x320xf32, #tpu.memory_space<vmem>>, %arg2: memref<16x144xbf16, #tpu.memory_space<vmem>>, %arg3: memref<16x1xf32, #tpu.memory_space<vmem>>, %arg4: memref<16x1xf32, #tpu.memory_space<vmem>>, %arg5: memref<16x144xbf16, #tpu.memory_space<vmem>>, %arg6: memref<16x1xf32, #tpu.memory_space<vmem>>, %arg7: memref<16x1xf32, #tpu.memory_space<vmem>>, %arg8: memref<16x320xf32, #tpu.memory_space<vmem>>, %arg9: memref<16x368xbf16, #tpu.memory_space<vmem>>) attributes {dimension_semantics = [], scalar_prefetch = 0 : i64, scratch_operands = 1 : i64, tpu.core_type = #tpu.core_type<tc>} {
    %c0 = arith.constant 0 : index
    %c0_0 = arith.constant 0 : index
    %c0_1 = arith.constant 0 : index
    %0 = vector.load %arg0[%c0, %c0_0, %c0_1] : memref<4x16x368xbf16, #tpu.memory_space<vmem>>, vector<1x16x368xbf16>
    %1 = vector.shape_cast %0 : vector<1x16x368xbf16> to vector<16x368xbf16>
    %c1 = arith.constant 1 : index
    %c0_2 = arith.constant 0 : index
    %c0_3 = arith.constant 0 : index
    %2 = vector.load %arg0[%c1, %c0_2, %c0_3] : memref<4x16x368xbf16, #tpu.memory_space<vmem>>, vector<1x16x368xbf16>
    %3 = vector.shape_cast %2 : vector<1x16x368xbf16> to vector<16x368xbf16>
    %4 = arith.maximumf %1, %3 : vector<16x368xbf16>
    %c2 = arith.constant 2 : index
    %c0_4 = arith.constant 0 : index
    %c0_5 = arith.constant 0 : index
    %5 = vector.load %arg0[%c2, %c0_4, %c0_5] : memref<4x16x368xbf16, #tpu.memory_space<vmem>>, vector<1x16x368xbf16>
    %6 = vector.shape_cast %5 : vector<1x16x368xbf16> to vector<16x368xbf16>
    %c3 = arith.constant 3 : index
    %c0_6 = arith.constant 0 : index
    %c0_7 = arith.constant 0 : index
    %7 = vector.load %arg0[%c3, %c0_6, %c0_7] : memref<4x16x368xbf16, #tpu.memory_space<vmem>>, vector<1x16x368xbf16>
    %8 = vector.shape_cast %7 : vector<1x16x368xbf16> to vector<16x368xbf16>
    %9 = arith.maximumf %6, %8 : vector<16x368xbf16>
    %10 = arith.maximumf %4, %9 : vector<16x368xbf16>
    %c0_8 = arith.constant 0 : index
    %c0_9 = arith.constant 0 : index
    %11 = vector.load %arg1[%c0_8, %c0_9] : memref<1x320xf32, #tpu.memory_space<vmem>>, vector<1x320xf32>
    %12 = vector.extract_strided_slice %10 {offsets = [0, 7], sizes = [16, 320], strides = [1, 1]} : vector<16x368xbf16> to vector<16x320xbf16>
    %13 = vector.extract_strided_slice %10 {offsets = [0, 8], sizes = [16, 320], strides = [1, 1]} : vector<16x368xbf16> to vector<16x320xbf16>
    %14 = vector.extract_strided_slice %10 {offsets = [0, 9], sizes = [16, 320], strides = [1, 1]} : vector<16x368xbf16> to vector<16x320xbf16>
    %15 = vector.extract_strided_slice %10 {offsets = [0, 23], sizes = [16, 320], strides = [1, 1]} : vector<16x368xbf16> to vector<16x320xbf16>
    %16 = vector.extract_strided_slice %10 {offsets = [0, 24], sizes = [16, 320], strides = [1, 1]} : vector<16x368xbf16> to vector<16x320xbf16>
    %17 = vector.extract_strided_slice %10 {offsets = [0, 25], sizes = [16, 320], strides = [1, 1]} : vector<16x368xbf16> to vector<16x320xbf16>
    %18 = vector.extract_strided_slice %10 {offsets = [0, 39], sizes = [16, 320], strides = [1, 1]} : vector<16x368xbf16> to vector<16x320xbf16>
    %19 = vector.extract_strided_slice %10 {offsets = [0, 40], sizes = [16, 320], strides = [1, 1]} : vector<16x368xbf16> to vector<16x320xbf16>
    %20 = vector.extract_strided_slice %10 {offsets = [0, 41], sizes = [16, 320], strides = [1, 1]} : vector<16x368xbf16> to vector<16x320xbf16>
    %21 = tpu.concatenate %12, %13, %14, %15, %16, %17, %18, %19, %20 in 0 : vector<16x320xbf16>, vector<16x320xbf16>, vector<16x320xbf16>, vector<16x320xbf16>, vector<16x320xbf16>, vector<16x320xbf16>, vector<16x320xbf16>, vector<16x320xbf16>, vector<16x320xbf16> -> vector<144x320xbf16>
    %c0_10 = arith.constant 0 : index
    %c0_11 = arith.constant 0 : index
    %22 = vector.load %arg2[%c0_10, %c0_11] : memref<16x144xbf16, #tpu.memory_space<vmem>>, vector<16x144xbf16>
    %cst = arith.constant dense<0.000000e+00> : vector<16x320xf32>
    %23 = tpu.matmul %22, %21, %cst {dimension_numbers = #tpu.dot_dimension_numbers<[1], [0], [0], [1], [0, 0, 1, 1], [], []>} : vector<16x144xbf16>, vector<144x320xbf16>, vector<16x320xf32> -> vector<16x320xf32>
    %24 = vector.broadcast %11 : vector<1x320xf32> to vector<16x320xf32>
    %25 = arith.mulf %23, %24 : vector<16x320xf32>
    %cst_12 = arith.constant dense<0.000000e+00> : vector<16xf32>
    %26 = vector.multi_reduction <add>, %25, %cst_12 [1] : vector<16x320xf32> to vector<16xf32>
    %27 = vector.shape_cast %26 : vector<16xf32> to vector<16x1xf32>
    %28 = arith.mulf %25, %25 : vector<16x320xf32>
    %cst_13 = arith.constant dense<0.000000e+00> : vector<16xf32>
    %29 = vector.multi_reduction <add>, %28, %cst_13 [1] : vector<16x320xf32> to vector<16xf32>
    %30 = vector.shape_cast %29 : vector<16xf32> to vector<16x1xf32>
    %cst_14 = arith.constant 7.812500e-03 : f32
    %31 = vector.broadcast %cst_14 : f32 to vector<16x1xf32>
    %32 = arith.mulf %27, %31 : vector<16x1xf32>
    %cst_15 = arith.constant 7.812500e-03 : f32
    %33 = vector.broadcast %cst_15 : f32 to vector<16x1xf32>
    %34 = arith.mulf %30, %33 : vector<16x1xf32>
    %35 = arith.mulf %32, %32 : vector<16x1xf32>
    %36 = arith.subf %34, %35 : vector<16x1xf32>
    %cst_16 = arith.constant 0.000000e+00 : f32
    %37 = vector.broadcast %cst_16 : f32 to vector<16x1xf32>
    %38 = arith.maximumf %36, %37 : vector<16x1xf32>
    %39 = vector.broadcast %32 : vector<16x1xf32> to vector<16x320xf32>
    %40 = arith.subf %23, %39 : vector<16x320xf32>
    %cst_17 = arith.constant 9.99999974E-6 : f32
    %41 = vector.broadcast %cst_17 : f32 to vector<16x1xf32>
    %42 = arith.addf %38, %41 : vector<16x1xf32>
    %43 = math.rsqrt %42 : vector<16x1xf32>
    %44 = vector.broadcast %43 : vector<16x1xf32> to vector<16x320xf32>
    %45 = arith.mulf %40, %44 : vector<16x320xf32>
    %c0_18 = arith.constant 0 : index
    %c0_19 = arith.constant 0 : index
    %46 = vector.load %arg3[%c0_18, %c0_19] : memref<16x1xf32, #tpu.memory_space<vmem>>, vector<16x1xf32>
    %47 = vector.broadcast %46 : vector<16x1xf32> to vector<16x320xf32>
    %48 = arith.mulf %45, %47 : vector<16x320xf32>
    %c0_20 = arith.constant 0 : index
    %c0_21 = arith.constant 0 : index
    %49 = vector.load %arg4[%c0_20, %c0_21] : memref<16x1xf32, #tpu.memory_space<vmem>>, vector<16x1xf32>
    %50 = vector.broadcast %49 : vector<16x1xf32> to vector<16x320xf32>
    %51 = arith.addf %48, %50 : vector<16x320xf32>
    %cst_22 = arith.constant 0.000000e+00 : f32
    %52 = vector.broadcast %cst_22 : f32 to vector<16x320xf32>
    %53 = arith.maximumf %51, %52 : vector<16x320xf32>
    %54 = vector.broadcast %11 : vector<1x320xf32> to vector<16x320xf32>
    %55 = arith.mulf %53, %54 : vector<16x320xf32>
    %cst_23 = arith.constant 0.000000e+00 : bf16
    %56 = vector.broadcast %cst_23 : bf16 to vector<16x24xbf16>
    %c0_24 = arith.constant 0 : index
    %c0_25 = arith.constant 0 : index
    %57 = vector.load %arg9[%c0_24, %c0_25] : memref<16x368xbf16, #tpu.memory_space<vmem>>, vector<16x24xbf16>
    tpu.vector_store %arg9[%c0_24, %c0_25], %56 {strides = array<i32>} : memref<16x368xbf16, #tpu.memory_space<vmem>>, vector<16x24xbf16>,
    %cst_26 = arith.constant 0.000000e+00 : bf16
    %58 = vector.broadcast %cst_26 : bf16 to vector<16x24xbf16>
    %c0_27 = arith.constant 0 : index
    %c344 = arith.constant 344 : index
    %59 = vector.load %arg9[%c0_27, %c344] : memref<16x368xbf16, #tpu.memory_space<vmem>>, vector<16x24xbf16>
    tpu.vector_store %arg9[%c0_27, %c344], %58 {strides = array<i32>} : memref<16x368xbf16, #tpu.memory_space<vmem>>, vector<16x24xbf16>,
    %60 = arith.truncf %55 : vector<16x320xf32> to vector<16x320xbf16>
    %c0_28 = arith.constant 0 : index
    %c24 = arith.constant 24 : index
    %61 = vector.load %arg9[%c0_28, %c24] : memref<16x368xbf16, #tpu.memory_space<vmem>>, vector<16x320xbf16>
    tpu.vector_store %arg9[%c0_28, %c24], %60 {strides = array<i32>} : memref<16x368xbf16, #tpu.memory_space<vmem>>, vector<16x320xbf16>,
    %c0_29 = arith.constant 0 : index
    %c7 = arith.constant 7 : index
    %62 = vector.load %arg9[%c0_29, %c7] : memref<16x368xbf16, #tpu.memory_space<vmem>>, vector<16x320xbf16>
    %c0_30 = arith.constant 0 : index
    %c8 = arith.constant 8 : index
    %63 = vector.load %arg9[%c0_30, %c8] : memref<16x368xbf16, #tpu.memory_space<vmem>>, vector<16x320xbf16>
    %c0_31 = arith.constant 0 : index
    %c9 = arith.constant 9 : index
    %64 = vector.load %arg9[%c0_31, %c9] : memref<16x368xbf16, #tpu.memory_space<vmem>>, vector<16x320xbf16>
    %c0_32 = arith.constant 0 : index
    %c23 = arith.constant 23 : index
    %65 = vector.load %arg9[%c0_32, %c23] : memref<16x368xbf16, #tpu.memory_space<vmem>>, vector<16x320xbf16>
    %c0_33 = arith.constant 0 : index
    %c24_34 = arith.constant 24 : index
    %66 = vector.load %arg9[%c0_33, %c24_34] : memref<16x368xbf16, #tpu.memory_space<vmem>>, vector<16x320xbf16>
    %c0_35 = arith.constant 0 : index
    %c25 = arith.constant 25 : index
    %67 = vector.load %arg9[%c0_35, %c25] : memref<16x368xbf16, #tpu.memory_space<vmem>>, vector<16x320xbf16>
    %c0_36 = arith.constant 0 : index
    %c39 = arith.constant 39 : index
    %68 = vector.load %arg9[%c0_36, %c39] : memref<16x368xbf16, #tpu.memory_space<vmem>>, vector<16x320xbf16>
    %c0_37 = arith.constant 0 : index
    %c40 = arith.constant 40 : index
    %69 = vector.load %arg9[%c0_37, %c40] : memref<16x368xbf16, #tpu.memory_space<vmem>>, vector<16x320xbf16>
    %c0_38 = arith.constant 0 : index
    %c41 = arith.constant 41 : index
    %70 = vector.load %arg9[%c0_38, %c41] : memref<16x368xbf16, #tpu.memory_space<vmem>>, vector<16x320xbf16>
    %71 = tpu.concatenate %62, %63, %64, %65, %66, %67, %68, %69, %70 in 0 : vector<16x320xbf16>, vector<16x320xbf16>, vector<16x320xbf16>, vector<16x320xbf16>, vector<16x320xbf16>, vector<16x320xbf16>, vector<16x320xbf16>, vector<16x320xbf16>, vector<16x320xbf16> -> vector<144x320xbf16>
    %c0_39 = arith.constant 0 : index
    %c0_40 = arith.constant 0 : index
    %72 = vector.load %arg5[%c0_39, %c0_40] : memref<16x144xbf16, #tpu.memory_space<vmem>>, vector<16x144xbf16>
    %cst_41 = arith.constant dense<0.000000e+00> : vector<16x320xf32>
    %73 = tpu.matmul %72, %71, %cst_41 {dimension_numbers = #tpu.dot_dimension_numbers<[1], [0], [0], [1], [0, 0, 1, 1], [], []>} : vector<16x144xbf16>, vector<144x320xbf16>, vector<16x320xf32> -> vector<16x320xf32>
    %74 = vector.broadcast %11 : vector<1x320xf32> to vector<16x320xf32>
    %75 = arith.mulf %73, %74 : vector<16x320xf32>
    %cst_42 = arith.constant dense<0.000000e+00> : vector<16xf32>
    %76 = vector.multi_reduction <add>, %75, %cst_42 [1] : vector<16x320xf32> to vector<16xf32>
    %77 = vector.shape_cast %76 : vector<16xf32> to vector<16x1xf32>
    %78 = arith.mulf %75, %75 : vector<16x320xf32>
    %cst_43 = arith.constant dense<0.000000e+00> : vector<16xf32>
    %79 = vector.multi_reduction <add>, %78, %cst_43 [1] : vector<16x320xf32> to vector<16xf32>
    %80 = vector.shape_cast %79 : vector<16xf32> to vector<16x1xf32>
    %cst_44 = arith.constant 7.812500e-03 : f32
    %81 = vector.broadcast %cst_44 : f32 to vector<16x1xf32>
    %82 = arith.mulf %77, %81 : vector<16x1xf32>
    %cst_45 = arith.constant 7.812500e-03 : f32
    %83 = vector.broadcast %cst_45 : f32 to vector<16x1xf32>
    %84 = arith.mulf %80, %83 : vector<16x1xf32>
    %85 = arith.mulf %82, %82 : vector<16x1xf32>
    %86 = arith.subf %84, %85 : vector<16x1xf32>
    %cst_46 = arith.constant 0.000000e+00 : f32
    %87 = vector.broadcast %cst_46 : f32 to vector<16x1xf32>
    %88 = arith.maximumf %86, %87 : vector<16x1xf32>
    %89 = vector.broadcast %82 : vector<16x1xf32> to vector<16x320xf32>
    %90 = arith.subf %73, %89 : vector<16x320xf32>
    %cst_47 = arith.constant 9.99999974E-6 : f32
    %91 = vector.broadcast %cst_47 : f32 to vector<16x1xf32>
    %92 = arith.addf %88, %91 : vector<16x1xf32>
    %93 = math.rsqrt %92 : vector<16x1xf32>
    %94 = vector.broadcast %93 : vector<16x1xf32> to vector<16x320xf32>
    %95 = arith.mulf %90, %94 : vector<16x320xf32>
    %c0_48 = arith.constant 0 : index
    %c0_49 = arith.constant 0 : index
    %96 = vector.load %arg6[%c0_48, %c0_49] : memref<16x1xf32, #tpu.memory_space<vmem>>, vector<16x1xf32>
    %97 = vector.broadcast %96 : vector<16x1xf32> to vector<16x320xf32>
    %98 = arith.mulf %95, %97 : vector<16x320xf32>
    %c0_50 = arith.constant 0 : index
    %c0_51 = arith.constant 0 : index
    %99 = vector.load %arg7[%c0_50, %c0_51] : memref<16x1xf32, #tpu.memory_space<vmem>>, vector<16x1xf32>
    %100 = vector.broadcast %99 : vector<16x1xf32> to vector<16x320xf32>
    %101 = arith.addf %98, %100 : vector<16x320xf32>
    %cst_52 = arith.constant 0.000000e+00 : f32
    %102 = vector.broadcast %cst_52 : f32 to vector<16x320xf32>
    %103 = arith.maximumf %101, %102 : vector<16x320xf32>
    %c0_53 = arith.constant 0 : index
    %c0_54 = arith.constant 0 : index
    %104 = vector.load %arg8[%c0_53, %c0_54] : memref<16x320xf32, #tpu.memory_space<vmem>>, vector<16x320xf32>
    tpu.vector_store %arg8[%c0_53, %c0_54], %103 {strides = array<i32>} : memref<16x320xf32, #tpu.memory_space<vmem>>, vector<16x320xf32>,
    return
  }
}

</mosaic_0001>

<llo_original>
// kernel: down_forward.1
$region0: #{down_forward.1}
  #allocation0 [shape = 'u32[]', space=smem, size = 0x4, offset = 0x4, fixed_abs, tag = 'smem constant byte address 0x4 - core index']
  #allocation1 [shape = 'u32[144,128]{1,0:T(1,128)}', space=vmem, size = 0x12000, scoped, tag = 'internal scratch']
  #allocation2 [shape = 'bf16[16,368]{1,0:T(16,128)(2,1)}', space=vmem, size = 0x3000, scoped, tag = 'scratch operand']
  %s0 = inlined_call_operand.vmem [shape: bf16[4,16,368], index: 0, kind: input, shape index: {}]
  %s1 = inlined_call_operand.vmem [shape: f32[1,320], index: 1, kind: input, shape index: {}]
  %s2 = inlined_call_operand.vmem [shape: bf16[16,144], index: 2, kind: input, shape index: {}]
  %s3 = inlined_call_operand.vmem [shape: f32[16,1], index: 3, kind: input, shape index: {}]
  %s4 = inlined_call_operand.vmem [shape: f32[16,1], index: 4, kind: input, shape index: {}]
  %s5 = inlined_call_operand.vmem [shape: bf16[16,144], index: 5, kind: input, shape index: {}]
  %s6 = inlined_call_operand.vmem [shape: f32[16,1], index: 6, kind: input, shape index: {}]
  %s7 = inlined_call_operand.vmem [shape: f32[16,1], index: 7, kind: input, shape index: {}]
  %s8 = inlined_call_operand.vmem [shape: f32[16,320], index: 8, kind: output, shape index: {}]
  %s9 = sld [smem:[#allocation0]]
  $region42: #{down_forward.1} parent=0
    _
  %s11 = ssub.s32 1, %s9
  %s12 = scalar_select 0, %s11, %s9
  // Predicated region
  $region2: #{down_forward.1} parent=0 // pred_check
    _
  $region3: #{down_forward.1} parent=0 // pred_check_branch
    %14 = sbr.rel (0) target = $region5
  $region4: #{down_forward.1} parent=0 // pred_region
    _
  $region5: #{down_forward.1} parent=0 // pred_fallthru
    _
  // Predicated region
  $region6: #{down_forward.1} parent=0 // pred_check
    _
  $region7: #{down_forward.1} parent=0 // pred_check_branch
    %16 = sbr.rel (0) target = $region9
  $region8: #{down_forward.1} parent=0 // pred_region
    _
  $region9: #{down_forward.1} parent=0 // pred_fallthru
    _
  // Predicated region
  $region10: #{down_forward.1} parent=0 // pred_check
    _
  $region11: #{down_forward.1} parent=0 // pred_check_branch
    %18 = sbr.rel (0) target = $region13
  $region12: #{down_forward.1} parent=0 // pred_region
    _
  $region13: #{down_forward.1} parent=0 // pred_fallthru
    _
  // Predicated region
  $region14: #{down_forward.1} parent=0 // pred_check
    _
  $region15: #{down_forward.1} parent=0 // pred_check_branch
    %20 = sbr.rel (0) target = $region17
  $region16: #{down_forward.1} parent=0 // pred_region
    _
  $region17: #{down_forward.1} parent=0 // pred_fallthru
    _
  // Predicated region
  $region18: #{down_forward.1} parent=0 // pred_check
    _
  $region19: #{down_forward.1} parent=0 // pred_check_branch
    %22 = sbr.rel (0) target = $region21
  $region20: #{down_forward.1} parent=0 // pred_region
    _
  $region21: #{down_forward.1} parent=0 // pred_fallthru
    _
  // Predicated region
  $region22: #{down_forward.1} parent=0 // pred_check
    _
  $region23: #{down_forward.1} parent=0 // pred_check_branch
    %24 = sbr.rel (0) target = $region25
  $region24: #{down_forward.1} parent=0 // pred_region
    _
  $region25: #{down_forward.1} parent=0 // pred_fallthru
    _
  // Predicated region
  $region26: #{down_forward.1} parent=0 // pred_check
    _
  $region27: #{down_forward.1} parent=0 // pred_check_branch
    %26 = sbr.rel (0) target = $region29
  $region28: #{down_forward.1} parent=0 // pred_region
    _
  $region29: #{down_forward.1} parent=0 // pred_fallthru
    _
  // Predicated region
  $region30: #{down_forward.1} parent=0 // pred_check
    _
  $region31: #{down_forward.1} parent=0 // pred_check_branch
    %28 = sbr.rel (0) target = $region33
  $region32: #{down_forward.1} parent=0 // pred_region
    _
  $region33: #{down_forward.1} parent=0 // pred_fallthru
    _
  %v30 = vld [vmem:[%s0] sm:$0xff]
  %v31 = vld [vmem:[%s0 + $0x8] sm:$0xf]
  %v32 = vld [vmem:[%s0 + $0xc] sm:$0xff]
  %v33 = vld [vmem:[%s0 + $0x14] sm:$0xf]
  %s34 = scalar_lea.vmem %s0, 24
  %v35 = vld [vmem:[%s34] sm:$0xff]
  %v36 = vld [vmem:[%s34 + $0x8] sm:$0xf]
  %v37 = vld [vmem:[%s34 + $0xc] sm:$0xff]
  %v38 = vld [vmem:[%s34 + $0x14] sm:$0xf]
  %v39 = vmax.bf16 %v30, %v35
  %v40 = vmax.bf16 %v31, %v36
  %v41 = vmax.bf16 %v32, %v37
  %v42 = vmax.bf16 %v33, %v38
  %s43 = scalar_lea.vmem %s0, 48
  %v44 = vld [vmem:[%s43] sm:$0xff]
  %v45 = vld [vmem:[%s43 + $0x8] sm:$0xf]
  %v46 = vld [vmem:[%s43 + $0xc] sm:$0xff]
  %v47 = vld [vmem:[%s43 + $0x14] sm:$0xf]
  %s48 = scalar_lea.vmem %s0, 72
  %v49 = vld [vmem:[%s48] sm:$0xff]
  %v50 = vld [vmem:[%s48 + $0x8] sm:$0xf]
  %v51 = vld [vmem:[%s48 + $0xc] sm:$0xff]
  %v52 = vld [vmem:[%s48 + $0x14] sm:$0xf]
  %v53 = vmax.bf16 %v44, %v49
  %v54 = vmax.bf16 %v45, %v50
  %v55 = vmax.bf16 %v46, %v51
  %v56 = vmax.bf16 %v47, %v52
  %v57 = vmax.bf16 %v39, %v53
  %v58 = vmax.bf16 %v40, %v54
  %v59 = vmax.bf16 %v41, %v55
  %v60 = vmax.bf16 %v42, %v56
  %v61 = vld [vmem:[%s1] sm:$0x7]
  %v66 = vunpack.c.l.b16 %v57
  %v67 = vunpack.c.h.b16 %v57
  %v68 = vunpack.c.l.b16 %v58
  %v69 = vunpack.c.l.b16 %v59
  %v70 = vunpack.c.h.b16 %v59
  %v71 = vunpack.c.l.b16 %v60
  %v72 = vpack.c.b16 %v69, %v66
  %v73 = vpack.c.b16 %v70, %v67
  %v74 = vpack.c.b16 %v71, %v68
  %75 = vrot.lane.b32.xlu0 %v72, 127
  %v76 = vpop.permute.xlu0 %75
  %77 = vrot.lane.b32.xlu0 %v73, 127
  %v78 = vpop.permute.xlu0 %77
  %79 = vrot.lane.b32.xlu0 %v74, 127
  %v80 = vpop.permute.xlu0 %79
  %vm81 = vcmask 1039360
  %v82 = vsel %vm81, %v76, %v78
  %v83 = vsel %vm81, %v78, %v80
  %84 = vrot.lane.b32.xlu0 %v72, 126
  %v85 = vpop.permute.xlu0 %84
  %86 = vrot.lane.b32.xlu0 %v73, 126
  %v87 = vpop.permute.xlu0 %86
  %88 = vrot.lane.b32.xlu0 %v74, 126
  %v89 = vpop.permute.xlu0 %88
  %vm90 = vcmask 1031168
  %v91 = vsel %vm90, %v85, %v87
  %v92 = vsel %vm90, %v87, %v89
  %93 = vrot.lane.b32.xlu0 %v72, 112
  %v94 = vpop.permute.xlu0 %93
  %95 = vrot.lane.b32.xlu0 %v73, 112
  %v96 = vpop.permute.xlu0 %95
  %97 = vrot.lane.b32.xlu0 %v74, 112
  %v98 = vpop.permute.xlu0 %97
  %vm99 = vcmask 916480
  %v100 = vsel %vm99, %v94, %v96
  %v101 = vsel %vm99, %v96, %v98
  %102 = vrot.lane.b32.xlu0 %v72, 111
  %v103 = vpop.permute.xlu0 %102
  %104 = vrot.lane.b32.xlu0 %v73, 111
  %v105 = vpop.permute.xlu0 %104
  %106 = vrot.lane.b32.xlu0 %v74, 111
  %v107 = vpop.permute.xlu0 %106
  %vm108 = vcmask 908288
  %v109 = vsel %vm108, %v103, %v105
  %v110 = vsel %vm108, %v105, %v107
  %111 = vrot.lane.b32.xlu0 %v72, 110
  %v112 = vpop.permute.xlu0 %111
  %113 = vrot.lane.b32.xlu0 %v73, 110
  %v114 = vpop.permute.xlu0 %113
  %115 = vrot.lane.b32.xlu0 %v74, 110
  %v116 = vpop.permute.xlu0 %115
  %vm117 = vcmask 900096
  %v118 = vsel %vm117, %v112, %v114
  %v119 = vsel %vm117, %v114, %v116
  %120 = vrot.lane.b32.xlu0 %v72, 96
  %v121 = vpop.permute.xlu0 %120
  %122 = vrot.lane.b32.xlu0 %v73, 96
  %v123 = vpop.permute.xlu0 %122
  %124 = vrot.lane.b32.xlu0 %v74, 96
  %v125 = vpop.permute.xlu0 %124
  %vm126 = vcmask 785408
  %v127 = vsel %vm126, %v121, %v123
  %v128 = vsel %vm126, %v123, %v125
  %129 = vrot.lane.b32.xlu0 %v72, 95
  %v130 = vpop.permute.xlu0 %129
  %131 = vrot.lane.b32.xlu0 %v73, 95
  %v132 = vpop.permute.xlu0 %131
  %133 = vrot.lane.b32.xlu0 %v74, 95
  %v134 = vpop.permute.xlu0 %133
  %vm135 = vcmask 777216
  %v136 = vsel %vm135, %v130, %v132
  %v137 = vsel %vm135, %v132, %v134
  %138 = vrot.lane.b32.xlu0 %v72, 94
  %v139 = vpop.permute.xlu0 %138
  %140 = vrot.lane.b32.xlu0 %v73, 94
  %v141 = vpop.permute.xlu0 %140
  %142 = vrot.lane.b32.xlu0 %v74, 94
  %v143 = vpop.permute.xlu0 %142
  %vm144 = vcmask 769024
  %v145 = vsel %vm144, %v139, %v141
  %v146 = vsel %vm144, %v141, %v143
  %v147 = vld [vmem:[%s2] sm:$0xff]
  %v148 = vld [vmem:[%s2 + $0x8] sm:$0xff]
  %v151 = vunpack.c.l.b16 %v147
  %v152 = vunpack.c.h.b16 %v147
  %v153 = vunpack.c.l.b16 %v148
  %v154 = vunpack.c.h.b16 %v148
  %v155 = vpack.c.b16 %v153, %v151
  %v156 = vpack.c.b16 %v154, %v152
  %158 = vrot.lane.b32.xlu0 %v72, 121
  %v159 = vpop.permute.xlu0 %158
  %160 = vrot.lane.b32.xlu0 %v73, 121
  %v161 = vpop.permute.xlu0 %160
  %162 = vrot.lane.b32.xlu0 %v74, 121
  %v163 = vpop.permute.xlu0 %162
  %164 = vrot.lane.b32.xlu0 %v82, 121
  %v165 = vpop.permute.xlu0 %164
  %166 = vrot.lane.b32.xlu0 %v83, 121
  %v167 = vpop.permute.xlu0 %166
  %168 = vrot.lane.b32.xlu0 %v80, 121
  %v169 = vpop.permute.xlu0 %168
  %170 = vrot.lane.b32.xlu0 %v91, 121
  %v171 = vpop.permute.xlu0 %170
  %172 = vrot.lane.b32.xlu0 %v92, 121
  %v173 = vpop.permute.xlu0 %172
  %174 = vrot.lane.b32.xlu0 %v89, 121
  %v175 = vpop.permute.xlu0 %174
  %176 = vrot.lane.b32.xlu0 %v100, 121
  %v177 = vpop.permute.xlu0 %176
  %178 = vrot.lane.b32.xlu0 %v101, 121
  %v179 = vpop.permute.xlu0 %178
  %180 = vrot.lane.b32.xlu0 %v98, 121
  %v181 = vpop.permute.xlu0 %180
  %182 = vrot.lane.b32.xlu0 %v109, 121
  %v183 = vpop.permute.xlu0 %182
  %184 = vrot.lane.b32.xlu0 %v110, 121
  %v185 = vpop.permute.xlu0 %184
  %186 = vrot.lane.b32.xlu0 %v107, 121
  %v187 = vpop.permute.xlu0 %186
  %188 = vrot.lane.b32.xlu0 %v118, 121
  %v189 = vpop.permute.xlu0 %188
  %190 = vrot.lane.b32.xlu0 %v119, 121
  %v191 = vpop.permute.xlu0 %190
  %192 = vrot.lane.b32.xlu0 %v116, 121
  %v193 = vpop.permute.xlu0 %192
  %194 = vrot.lane.b32.xlu0 %v127, 121
  %v195 = vpop.permute.xlu0 %194
  %196 = vrot.lane.b32.xlu0 %v128, 121
  %v197 = vpop.permute.xlu0 %196
  %198 = vrot.lane.b32.xlu0 %v125, 121
  %v199 = vpop.permute.xlu0 %198
  %200 = vrot.lane.b32.xlu0 %v136, 121
  %v201 = vpop.permute.xlu0 %200
  %202 = vrot.lane.b32.xlu0 %v137, 121
  %v203 = vpop.permute.xlu0 %202
  %204 = vrot.lane.b32.xlu0 %v134, 121
  %v205 = vpop.permute.xlu0 %204
  %206 = vrot.lane.b32.xlu0 %v145, 121
  %v207 = vpop.permute.xlu0 %206
  %208 = vrot.lane.b32.xlu0 %v146, 121
  %v209 = vpop.permute.xlu0 %208
  %210 = vrot.lane.b32.xlu0 %v143, 121
  %v211 = vpop.permute.xlu0 %210
  %vm212 = vcmask 990208
  %v213 = vsel %vm212, %v159, %v161
  %v214 = vsel %vm212, %v161, %v163
  %v215 = vsel %vm212, %v165, %v167
  %v216 = vsel %vm212, %v167, %v169
  %v217 = vsel %vm212, %v171, %v173
  %v218 = vsel %vm212, %v173, %v175
  %v219 = vsel %vm212, %v177, %v179
  %v220 = vsel %vm212, %v179, %v181
  %v221 = vsel %vm212, %v183, %v185
  %v222 = vsel %vm212, %v185, %v187
  %v223 = vsel %vm212, %v189, %v191
  %v224 = vsel %vm212, %v191, %v193
  %v225 = vsel %vm212, %v195, %v197
  %v226 = vsel %vm212, %v197, %v199
  %v227 = vsel %vm212, %v201, %v203
  %v228 = vsel %vm212, %v203, %v205
  %v229 = vsel %vm212, %v207, %v209
  %v230 = vsel %vm212, %v209, %v211
  %vm258 = vcmask 130048
  %v260 = vsel %vm258, %v156, 0
  %262 = vmatprep.subr.bf16.mxu0 %v214
  %263 = vmatpush1.bf16.msra.mxu0 %v213
  %264 = vmatprep.subr.bf16.mxu0 %v216
  %265 = vmatpush1.bf16.msra.mxu0 %v215
  %266 = vmatprep.subr.bf16.mxu0 %v218
  %267 = vmatpush1.bf16.msra.mxu0 %v217
  %268 = vmatprep.subr.bf16.mxu0 %v220
  %269 = vmatpush1.bf16.msra.mxu0 %v219
  %270 = vmatprep.subr.bf16.mxu0 %v222
  %271 = vmatpush1.bf16.msra.mxu0 %v221
  %272 = vmatprep.subr.bf16.mxu0 %v224
  %273 = vmatpush1.bf16.msra.mxu0 %v223
  %274 = vmatprep.subr.bf16.mxu0 %v226
  %275 = vmatpush1.bf16.msra.mxu0 %v225
  %276 = vmatprep.subr.bf16.mxu0 %v228
  %277 = vmatpush1.bf16.msra.mxu0 %v227
  %278 = vmatprep.subr.bf16.mxu0 %v230
  %279 = vmatpush1.bf16.msra.mxu0 %v229
  %280 = vmatprep.subr.bf16.mxu0 0
  %281 = vmatpush1.bf16.msra.mxu0 0
  %282 = vmatprep.subr.bf16.mxu0 0
  %283 = vmatpush1.bf16.msra.mxu0 0
  %284 = vmatprep.subr.bf16.mxu0 0
  %285 = vmatpush1.bf16.msra.mxu0 0
  %286 = vmatprep.subr.bf16.mxu0 0
  %287 = vmatpush1.bf16.msra.mxu0 0
  %288 = vmatprep.subr.bf16.mxu0 0
  %289 = vmatpush1.bf16.msra.mxu0 0
  %290 = vmatprep.subr.bf16.mxu0 0
  %291 = vmatpush1.bf16.msra.mxu0 0
  %292 = vmatprep.subr.bf16.mxu0 0
  %293 = vmatpush1.bf16.msra.mxu0 0
  %294 = vmatprep.mubr.bf16.mxu0 %v260
  %295 = vmatmul.mubr.bf16.gmra.mrb[0].mxu0 %v155
  %v296 = vpop.f32.mrb[0].mxu0
  %v297 = vadd.f32 0.0, %v296
  %v298 = vpop.f32.mrb[0].mxu0
  %v299 = vadd.f32 0.0, %v298
  %v300 = vpop.f32.mrb[0].mxu0
  %v301 = vadd.f32 0.0, %v300
  %v302 = vpop.f32.mrb[0].mxu0
  %v303 = vadd.f32 0.0, %v302
  %304 = vdwg.mxu0
  %305 = vmatprep.subr.bf16.mxu0 0
  %306 = vmatpush1.bf16.msra.mxu0 %v163
  %307 = vmatprep.subr.bf16.mxu0 0
  %308 = vmatpush1.bf16.msra.mxu0 %v169
  %309 = vmatprep.subr.bf16.mxu0 0
  %310 = vmatpush1.bf16.msra.mxu0 %v175
  %311 = vmatprep.subr.bf16.mxu0 0
  %312 = vmatpush1.bf16.msra.mxu0 %v181
  %313 = vmatprep.subr.bf16.mxu0 0
  %314 = vmatpush1.bf16.msra.mxu0 %v187
  %315 = vmatprep.subr.bf16.mxu0 0
  %316 = vmatpush1.bf16.msra.mxu0 %v193
  %317 = vmatprep.subr.bf16.mxu0 0
  %318 = vmatpush1.bf16.msra.mxu0 %v199
  %319 = vmatprep.subr.bf16.mxu0 0
  %320 = vmatpush1.bf16.msra.mxu0 %v205
  %321 = vmatprep.subr.bf16.mxu0 0
  %322 = vmatpush1.bf16.msra.mxu0 %v211
  %323 = vmatprep.subr.bf16.mxu0 0
  %324 = vmatpush1.bf16.msra.mxu0 0
  %325 = vmatprep.subr.bf16.mxu0 0
  %326 = vmatpush1.bf16.msra.mxu0 0
  %327 = vmatprep.subr.bf16.mxu0 0
  %328 = vmatpush1.bf16.msra.mxu0 0
  %329 = vmatprep.subr.bf16.mxu0 0
  %330 = vmatpush1.bf16.msra.mxu0 0
  %331 = vmatprep.subr.bf16.mxu0 0
  %332 = vmatpush1.bf16.msra.mxu0 0
  %333 = vmatprep.subr.bf16.mxu0 0
  %334 = vmatpush1.bf16.msra.mxu0 0
  %335 = vmatprep.subr.bf16.mxu0 0
  %336 = vmatpush1.bf16.msra.mxu0 0
  %337 = vmatprep.mubr.bf16.mxu0 %v260
  %338 = vmatmul.mubr.bf16.gmra.mrb[0].mxu0 %v155
  %v339 = vpop.f32.mrb[0].mxu0
  %v340 = vadd.f32 0.0, %v339
  %v341 = vpop.f32.mrb[0].mxu0
  %v342 = vpop.f32.mrb[0].mxu0
  %v343 = vadd.f32 0.0, %v342
  %v344 = vpop.f32.mrb[0].mxu0
  %345 = vdwg.mxu0
  %v347 = vlaneseq
  %v348 = vshrl.u32 %v347, 7
  %v349 = vsub.s32 0, %v348
  %v350 = vrot.slane %v61, %v349
  %v351 = vlaneseq
  %v352 = vshrl.u32 %v351, 7
  %v353 = vsub.s32 1, %v352
  %v354 = vrot.slane %v61, %v353
  %v355 = vlaneseq
  %v356 = vshrl.u32 %v355, 7
  %v357 = vsub.s32 2, %v356
  %v358 = vrot.slane %v61, %v357
  %v362 = vmul.f32 %v297, %v350
  %v363 = vmul.f32 %v299, %v354
  %v364 = vmul.f32 %v340, %v358
  %v365 = vmul.f32 %v301, %v350
  %v366 = vmul.f32 %v303, %v354
  %v367 = vmul.f32 %v343, %v358
  %v368 = vadd.f32 %v362, %v363
  %vm369 = vcmask 523264
  %v370 = vsel %vm369, %v364, 0.0
  %v371 = vadd.f32 %v368, %v370
  %372 = vadd.xlane.f32.xlu0 %v371
  %v373 = vpop.xlane.xlu0 %372
  %v374 = vadd.f32 %v365, %v366
  %v375 = vsel %vm369, %v367, 0.0
  %v376 = vadd.f32 %v374, %v375
  %377 = vadd.xlane.f32.xlu0 %v376
  %v378 = vpop.xlane.xlu0 %377
  %v379 = vmul.f32 %v362, %v362
  %v380 = vmul.f32 %v363, %v363
  %v381 = vmul.f32 %v364, %v364
  %v382 = vmul.f32 %v365, %v365
  %v383 = vmul.f32 %v366, %v366
  %v384 = vmul.f32 %v367, %v367
  %v385 = vadd.f32 %v379, %v380
  %v386 = vsel %vm369, %v381, 0.0
  %v387 = vadd.f32 %v385, %v386
  %388 = vadd.xlane.f32.xlu0 %v387
  %v389 = vpop.xlane.xlu0 %388
  %v390 = vadd.f32 %v382, %v383
  %v391 = vsel %vm369, %v384, 0.0
  %v392 = vadd.f32 %v390, %v391
  %393 = vadd.xlane.f32.xlu0 %v392
  %v394 = vpop.xlane.xlu0 %393
  %v395 = vmul.f32 %v373, 0.0078125
  %v396 = vmul.f32 %v378, 0.0078125
  %v397 = vmul.f32 %v389, 0.0078125
  %v398 = vmul.f32 %v394, 0.0078125
  %v399 = vmul.f32 %v395, %v395
  %v400 = vmul.f32 %v396, %v396
  %v401 = vsub.f32 %v397, %v399
  %v402 = vsub.f32 %v398, %v400
  %v403 = vmax.f32 %v401, 0.0
  %v404 = vmax.f32 %v402, 0.0
  %v405 = vsub.f32 %v297, %v395
  %v406 = vsub.f32 %v299, %v395
  %v407 = vsub.f32 %v340, %v395
  %v408 = vsub.f32 %v301, %v396
  %v409 = vsub.f32 %v303, %v396
  %v410 = vsub.f32 %v343, %v396
  %v411 = vadd.f32 %v403, 1e-05
  %v412 = vadd.f32 %v404, 1e-05
  %v413 = vrsqrt.pop %v411
  %v414 = vrsqrt.pop %v412
  %v415 = vmul.f32 %v405, %v413
  %v416 = vmul.f32 %v406, %v413
  %v417 = vmul.f32 %v407, %v413
  %v418 = vmul.f32 %v408, %v414
  %v419 = vmul.f32 %v409, %v414
  %v420 = vmul.f32 %v410, %v414
  %v421 = vld [vmem:[%s3] sm:$0xff]
  %v422 = vld [vmem:[%s3 + $0x8] sm:$0xff]
  %424 = vset.pattern.permute.xlu0 0
  %425 = vperm.xlu0 %424, %v421
  %v426 = vpop.permute.xlu0 %425
  %429 = vset.pattern.permute.xlu0 0
  %430 = vperm.xlu0 %429, %v422
  %v431 = vpop.permute.xlu0 %430
  %v433 = vmul.f32 %v415, %v426
  %v434 = vmul.f32 %v416, %v426
  %v435 = vmul.f32 %v417, %v426
  %v436 = vmul.f32 %v418, %v431
  %v437 = vmul.f32 %v419, %v431
  %v438 = vmul.f32 %v420, %v431
  %v439 = vld [vmem:[%s4] sm:$0xff]
  %v440 = vld [vmem:[%s4 + $0x8] sm:$0xff]
  %442 = vset.pattern.permute.xlu0 0
  %443 = vperm.xlu0 %442, %v439
  %v444 = vpop.permute.xlu0 %443
  %447 = vset.pattern.permute.xlu0 0
  %448 = vperm.xlu0 %447, %v440
  %v449 = vpop.permute.xlu0 %448
  %v451 = vadd.f32 %v433, %v444
  %v452 = vadd.f32 %v434, %v444
  %v453 = vadd.f32 %v435, %v444
  %v454 = vadd.f32 %v436, %v449
  %v455 = vadd.f32 %v437, %v449
  %v456 = vadd.f32 %v438, %v449
  %v457 = vmax.f32 %v451, 0.0
  %v458 = vmax.f32 %v452, 0.0
  %v459 = vmax.f32 %v453, 0.0
  %v460 = vmax.f32 %v454, 0.0
  %v461 = vmax.f32 %v455, 0.0
  %v462 = vmax.f32 %v456, 0.0
  %v463 = vmul.f32 %v457, %v350
  %v464 = vmul.f32 %v458, %v354
  %v465 = vmul.f32 %v459, %v358
  %v466 = vmul.f32 %v460, %v350
  %v467 = vmul.f32 %v461, %v354
  %v468 = vmul.f32 %v462, %v358
  %vm469 = vcmask 195584
  %470 = vst.msk [vmem:[#allocation2] sm:$0xff] %vm469, 0
  %vm471 = vcmask 917184
  %472 = vst.msk [vmem:[#allocation2 + $0x10] sm:$0xff] %vm471, 0
  %v473 = vpack.c.bf16 %v466, %v463
  %v474 = vpack.c.bf16 %v467, %v464
  %v475 = vpack.c.bf16 %v468, %v465
  %479 = vrot.lane.b32.xlu0 %v473, 24
  %v480 = vpop.permute.xlu0 %479
  %481 = vrot.lane.b32.xlu0 %v474, 24
  %v482 = vpop.permute.xlu0 %481
  %483 = vrot.lane.b32.xlu0 %v475, 24
  %v484 = vpop.permute.xlu0 %483
  %vm485 = vcmask 195584
  %v486 = vsel %vm485, %v480, %v482
  %v487 = vsel %vm485, %v482, %v484
  %vm491 = vcmask 1047744
  %492 = vst.msk [vmem:[#allocation2] sm:$0xff] %vm491, %v480
  %493 = vst [vmem:[#allocation2 + $0x8] sm:$0xff] %v486
  %vm494 = vcmask 719872
  %495 = vst.msk [vmem:[#allocation2 + $0x10] sm:$0xff] %vm494, %v487
  %v496 = vld [vmem:[#allocation2] sm:$0xff]
  %v497 = vld [vmem:[#allocation2 + $0x8] sm:$0xff]
  %v498 = vld [vmem:[#allocation2 + $0x10] sm:$0xff]
  %502 = vrot.lane.b32.xlu0 %v496, 127
  %v503 = vpop.permute.xlu0 %502
  %504 = vrot.lane.b32.xlu0 %v497, 127
  %v505 = vpop.permute.xlu0 %504
  %506 = vrot.lane.b32.xlu0 %v498, 127
  %v507 = vpop.permute.xlu0 %506
  %v508 = vsel %vm81, %v503, %v505
  %v509 = vsel %vm81, %v505, %v507
  %510 = vrot.lane.b32.xlu0 %v496, 126
  %v511 = vpop.permute.xlu0 %510
  %512 = vrot.lane.b32.xlu0 %v497, 126
  %v513 = vpop.permute.xlu0 %512
  %514 = vrot.lane.b32.xlu0 %v498, 126
  %v515 = vpop.permute.xlu0 %514
  %v516 = vsel %vm90, %v511, %v513
  %v517 = vsel %vm90, %v513, %v515
  %518 = vrot.lane.b32.xlu0 %v496, 112
  %v519 = vpop.permute.xlu0 %518
  %520 = vrot.lane.b32.xlu0 %v497, 112
  %v521 = vpop.permute.xlu0 %520
  %522 = vrot.lane.b32.xlu0 %v498, 112
  %v523 = vpop.permute.xlu0 %522
  %v524 = vsel %vm99, %v519, %v521
  %v525 = vsel %vm99, %v521, %v523
  %526 = vrot.lane.b32.xlu0 %v496, 111
  %v527 = vpop.permute.xlu0 %526
  %528 = vrot.lane.b32.xlu0 %v497, 111
  %v529 = vpop.permute.xlu0 %528
  %530 = vrot.lane.b32.xlu0 %v498, 111
  %v531 = vpop.permute.xlu0 %530
  %v532 = vsel %vm108, %v527, %v529
  %v533 = vsel %vm108, %v529, %v531
  %534 = vrot.lane.b32.xlu0 %v496, 110
  %v535 = vpop.permute.xlu0 %534
  %536 = vrot.lane.b32.xlu0 %v497, 110
  %v537 = vpop.permute.xlu0 %536
  %538 = vrot.lane.b32.xlu0 %v498, 110
  %v539 = vpop.permute.xlu0 %538
  %v540 = vsel %vm117, %v535, %v537
  %v541 = vsel %vm117, %v537, %v539
  %542 = vrot.lane.b32.xlu0 %v496, 96
  %v543 = vpop.permute.xlu0 %542
  %544 = vrot.lane.b32.xlu0 %v497, 96
  %v545 = vpop.permute.xlu0 %544
  %546 = vrot.lane.b32.xlu0 %v498, 96
  %v547 = vpop.permute.xlu0 %546
  %v548 = vsel %vm126, %v543, %v545
  %v549 = vsel %vm126, %v545, %v547
  %550 = vrot.lane.b32.xlu0 %v496, 95
  %v551 = vpop.permute.xlu0 %550
  %552 = vrot.lane.b32.xlu0 %v497, 95
  %v553 = vpop.permute.xlu0 %552
  %554 = vrot.lane.b32.xlu0 %v498, 95
  %v555 = vpop.permute.xlu0 %554
  %v556 = vsel %vm135, %v551, %v553
  %v557 = vsel %vm135, %v553, %v555
  %558 = vrot.lane.b32.xlu0 %v496, 94
  %v559 = vpop.permute.xlu0 %558
  %560 = vrot.lane.b32.xlu0 %v497, 94
  %v561 = vpop.permute.xlu0 %560
  %562 = vrot.lane.b32.xlu0 %v498, 94
  %v563 = vpop.permute.xlu0 %562
  %v564 = vsel %vm144, %v559, %v561
  %v565 = vsel %vm144, %v561, %v563
  %v566 = vld [vmem:[%s5] sm:$0xff]
  %v567 = vld [vmem:[%s5 + $0x8] sm:$0xff]
  %v570 = vunpack.c.l.b16 %v566
  %v571 = vunpack.c.h.b16 %v566
  %v572 = vunpack.c.l.b16 %v567
  %v573 = vunpack.c.h.b16 %v567
  %v574 = vpack.c.b16 %v572, %v570
  %v575 = vpack.c.b16 %v573, %v571
  %577 = vrot.lane.b32.xlu0 %v496, 121
  %v578 = vpop.permute.xlu0 %577
  %579 = vrot.lane.b32.xlu0 %v497, 121
  %v580 = vpop.permute.xlu0 %579
  %581 = vrot.lane.b32.xlu0 %v498, 121
  %v582 = vpop.permute.xlu0 %581
  %583 = vrot.lane.b32.xlu0 %v508, 121
  %v584 = vpop.permute.xlu0 %583
  %585 = vrot.lane.b32.xlu0 %v509, 121
  %v586 = vpop.permute.xlu0 %585
  %587 = vrot.lane.b32.xlu0 %v507, 121
  %v588 = vpop.permute.xlu0 %587
  %589 = vrot.lane.b32.xlu0 %v516, 121
  %v590 = vpop.permute.xlu0 %589
  %591 = vrot.lane.b32.xlu0 %v517, 121
  %v592 = vpop.permute.xlu0 %591
  %593 = vrot.lane.b32.xlu0 %v515, 121
  %v594 = vpop.permute.xlu0 %593
  %595 = vrot.lane.b32.xlu0 %v524, 121
  %v596 = vpop.permute.xlu0 %595
  %597 = vrot.lane.b32.xlu0 %v525, 121
  %v598 = vpop.permute.xlu0 %597
  %599 = vrot.lane.b32.xlu0 %v523, 121
  %v600 = vpop.permute.xlu0 %599
  %601 = vrot.lane.b32.xlu0 %v532, 121
  %v602 = vpop.permute.xlu0 %601
  %603 = vrot.lane.b32.xlu0 %v533, 121
  %v604 = vpop.permute.xlu0 %603
  %605 = vrot.lane.b32.xlu0 %v531, 121
  %v606 = vpop.permute.xlu0 %605
  %607 = vrot.lane.b32.xlu0 %v540, 121
  %v608 = vpop.permute.xlu0 %607
  %609 = vrot.lane.b32.xlu0 %v541, 121
  %v610 = vpop.permute.xlu0 %609
  %611 = vrot.lane.b32.xlu0 %v539, 121
  %v612 = vpop.permute.xlu0 %611
  %613 = vrot.lane.b32.xlu0 %v548, 121
  %v614 = vpop.permute.xlu0 %613
  %615 = vrot.lane.b32.xlu0 %v549, 121
  %v616 = vpop.permute.xlu0 %615
  %617 = vrot.lane.b32.xlu0 %v547, 121
  %v618 = vpop.permute.xlu0 %617
  %619 = vrot.lane.b32.xlu0 %v556, 121
  %v620 = vpop.permute.xlu0 %619
  %621 = vrot.lane.b32.xlu0 %v557, 121
  %v622 = vpop.permute.xlu0 %621
  %623 = vrot.lane.b32.xlu0 %v555, 121
  %v624 = vpop.permute.xlu0 %623
  %625 = vrot.lane.b32.xlu0 %v564, 121
  %v626 = vpop.permute.xlu0 %625
  %627 = vrot.lane.b32.xlu0 %v565, 121
  %v628 = vpop.permute.xlu0 %627
  %629 = vrot.lane.b32.xlu0 %v563, 121
  %v630 = vpop.permute.xlu0 %629
  %v631 = vsel %vm212, %v578, %v580
  %v632 = vsel %vm212, %v580, %v582
  %v633 = vsel %vm212, %v584, %v586
  %v634 = vsel %vm212, %v586, %v588
  %v635 = vsel %vm212, %v590, %v592
  %v636 = vsel %vm212, %v592, %v594
  %v637 = vsel %vm212, %v596, %v598
  %v638 = vsel %vm212, %v598, %v600
  %v639 = vsel %vm212, %v602, %v604
  %v640 = vsel %vm212, %v604, %v606
  %v641 = vsel %vm212, %v608, %v610
  %v642 = vsel %vm212, %v610, %v612
  %v643 = vsel %vm212, %v614, %v616
  %v644 = vsel %vm212, %v616, %v618
  %v645 = vsel %vm212, %v620, %v622
  %v646 = vsel %vm212, %v622, %v624
  %v647 = vsel %vm212, %v626, %v628
  %v648 = vsel %vm212, %v628, %v630
  %v677 = vsel %vm258, %v575, 0
  %679 = vmatprep.subr.bf16.mxu0 %v632
  %680 = vmatpush1.bf16.msra.mxu0 %v631
  %681 = vmatprep.subr.bf16.mxu0 %v634
  %682 = vmatpush1.bf16.msra.mxu0 %v633
  %683 = vmatprep.subr.bf16.mxu0 %v636
  %684 = vmatpush1.bf16.msra.mxu0 %v635
  %685 = vmatprep.subr.bf16.mxu0 %v638
  %686 = vmatpush1.bf16.msra.mxu0 %v637
  %687 = vmatprep.subr.bf16.mxu0 %v640
  %688 = vmatpush1.bf16.msra.mxu0 %v639
  %689 = vmatprep.subr.bf16.mxu0 %v642
  %690 = vmatpush1.bf16.msra.mxu0 %v641
  %691 = vmatprep.subr.bf16.mxu0 %v644
  %692 = vmatpush1.bf16.msra.mxu0 %v643
  %693 = vmatprep.subr.bf16.mxu0 %v646
  %694 = vmatpush1.bf16.msra.mxu0 %v645
  %695 = vmatprep.subr.bf16.mxu0 %v648
  %696 = vmatpush1.bf16.msra.mxu0 %v647
  %697 = vmatprep.subr.bf16.mxu0 0
  %698 = vmatpush1.bf16.msra.mxu0 0
  %699 = vmatprep.subr.bf16.mxu0 0
  %700 = vmatpush1.bf16.msra.mxu0 0
  %701 = vmatprep.subr.bf16.mxu0 0
  %702 = vmatpush1.bf16.msra.mxu0 0
  %703 = vmatprep.subr.bf16.mxu0 0
  %704 = vmatpush1.bf16.msra.mxu0 0
  %705 = vmatprep.subr.bf16.mxu0 0
  %706 = vmatpush1.bf16.msra.mxu0 0
  %707 = vmatprep.subr.bf16.mxu0 0
  %708 = vmatpush1.bf16.msra.mxu0 0
  %709 = vmatprep.subr.bf16.mxu0 0
  %710 = vmatpush1.bf16.msra.mxu0 0
  %711 = vmatprep.mubr.bf16.mxu0 %v677
  %712 = vmatmul.mubr.bf16.gmra.mrb[0].mxu0 %v574
  %v713 = vpop.f32.mrb[0].mxu0
  %v714 = vadd.f32 0.0, %v713
  %v715 = vpop.f32.mrb[0].mxu0
  %v716 = vadd.f32 0.0, %v715
  %v717 = vpop.f32.mrb[0].mxu0
  %v718 = vadd.f32 0.0, %v717
  %v719 = vpop.f32.mrb[0].mxu0
  %v720 = vadd.f32 0.0, %v719
  %721 = vdwg.mxu0
  %722 = vmatprep.subr.bf16.mxu0 0
  %723 = vmatpush1.bf16.msra.mxu0 %v582
  %724 = vmatprep.subr.bf16.mxu0 0
  %725 = vmatpush1.bf16.msra.mxu0 %v588
  %726 = vmatprep.subr.bf16.mxu0 0
  %727 = vmatpush1.bf16.msra.mxu0 %v594
  %728 = vmatprep.subr.bf16.mxu0 0
  %729 = vmatpush1.bf16.msra.mxu0 %v600
  %730 = vmatprep.subr.bf16.mxu0 0
  %731 = vmatpush1.bf16.msra.mxu0 %v606
  %732 = vmatprep.subr.bf16.mxu0 0
  %733 = vmatpush1.bf16.msra.mxu0 %v612
  %734 = vmatprep.subr.bf16.mxu0 0
  %735 = vmatpush1.bf16.msra.mxu0 %v618
  %736 = vmatprep.subr.bf16.mxu0 0
  %737 = vmatpush1.bf16.msra.mxu0 %v624
  %738 = vmatprep.subr.bf16.mxu0 0
  %739 = vmatpush1.bf16.msra.mxu0 %v630
  %740 = vmatprep.subr.bf16.mxu0 0
  %741 = vmatpush1.bf16.msra.mxu0 0
  %742 = vmatprep.subr.bf16.mxu0 0
  %743 = vmatpush1.bf16.msra.mxu0 0
  %744 = vmatprep.subr.bf16.mxu0 0
  %745 = vmatpush1.bf16.msra.mxu0 0
  %746 = vmatprep.subr.bf16.mxu0 0
  %747 = vmatpush1.bf16.msra.mxu0 0
  %748 = vmatprep.subr.bf16.mxu0 0
  %749 = vmatpush1.bf16.msra.mxu0 0
  %750 = vmatprep.subr.bf16.mxu0 0
  %751 = vmatpush1.bf16.msra.mxu0 0
  %752 = vmatprep.subr.bf16.mxu0 0
  %753 = vmatpush1.bf16.msra.mxu0 0
  %754 = vmatprep.mubr.bf16.mxu0 %v677
  %755 = vmatmul.mubr.bf16.gmra.mrb[0].mxu0 %v574
  %v756 = vpop.f32.mrb[0].mxu0
  %v757 = vadd.f32 0.0, %v756
  %v758 = vpop.f32.mrb[0].mxu0
  %v759 = vpop.f32.mrb[0].mxu0
  %v760 = vadd.f32 0.0, %v759
  %v761 = vpop.f32.mrb[0].mxu0
  %762 = vdwg.mxu0
  %v763 = vmul.f32 %v714, %v350
  %v764 = vmul.f32 %v716, %v354
  %v765 = vmul.f32 %v757, %v358
  %v766 = vmul.f32 %v718, %v350
  %v767 = vmul.f32 %v720, %v354
  %v768 = vmul.f32 %v760, %v358
  %v769 = vadd.f32 %v763, %v764
  %v770 = vsel %vm369, %v765, 0.0
  %v771 = vadd.f32 %v769, %v770
  %772 = vadd.xlane.f32.xlu0 %v771
  %v773 = vpop.xlane.xlu0 %772
  %v774 = vadd.f32 %v766, %v767
  %v775 = vsel %vm369, %v768, 0.0
  %v776 = vadd.f32 %v774, %v775
  %777 = vadd.xlane.f32.xlu0 %v776
  %v778 = vpop.xlane.xlu0 %777
  %v779 = vmul.f32 %v763, %v763
  %v780 = vmul.f32 %v764, %v764
  %v781 = vmul.f32 %v765, %v765
  %v782 = vmul.f32 %v766, %v766
  %v783 = vmul.f32 %v767, %v767
  %v784 = vmul.f32 %v768, %v768
  %v785 = vadd.f32 %v779, %v780
  %v786 = vsel %vm369, %v781, 0.0
  %v787 = vadd.f32 %v785, %v786
  %788 = vadd.xlane.f32.xlu0 %v787
  %v789 = vpop.xlane.xlu0 %788
  %v790 = vadd.f32 %v782, %v783
  %v791 = vsel %vm369, %v784, 0.0
  %v792 = vadd.f32 %v790, %v791
  %793 = vadd.xlane.f32.xlu0 %v792
  %v794 = vpop.xlane.xlu0 %793
  %v795 = vmul.f32 %v773, 0.0078125
  %v796 = vmul.f32 %v778, 0.0078125
  %v797 = vmul.f32 %v789, 0.0078125
  %v798 = vmul.f32 %v794, 0.0078125
  %v799 = vmul.f32 %v795, %v795
  %v800 = vmul.f32 %v796, %v796
  %v801 = vsub.f32 %v797, %v799
  %v802 = vsub.f32 %v798, %v800
  %v803 = vmax.f32 %v801, 0.0
  %v804 = vmax.f32 %v802, 0.0
  %v805 = vsub.f32 %v714, %v795
  %v806 = vsub.f32 %v716, %v795
  %v807 = vsub.f32 %v757, %v795
  %v808 = vsub.f32 %v718, %v796
  %v809 = vsub.f32 %v720, %v796
  %v810 = vsub.f32 %v760, %v796
  %v811 = vadd.f32 %v803, 1e-05
  %v812 = vadd.f32 %v804, 1e-05
  %v813 = vrsqrt.pop %v811
  %v814 = vrsqrt.pop %v812
  %v815 = vmul.f32 %v805, %v813
  %v816 = vmul.f32 %v806, %v813
  %v817 = vmul.f32 %v807, %v813
  %v818 = vmul.f32 %v808, %v814
  %v819 = vmul.f32 %v809, %v814
  %v820 = vmul.f32 %v810, %v814
  %v821 = vld [vmem:[%s6] sm:$0xff]
  %v822 = vld [vmem:[%s6 + $0x8] sm:$0xff]
  %824 = vset.pattern.permute.xlu0 0
  %825 = vperm.xlu0 %824, %v821
  %v826 = vpop.permute.xlu0 %825
  %829 = vset.pattern.permute.xlu0 0
  %830 = vperm.xlu0 %829, %v822
  %v831 = vpop.permute.xlu0 %830
  %v833 = vmul.f32 %v815, %v826
  %v834 = vmul.f32 %v816, %v826
  %v835 = vmul.f32 %v817, %v826
  %v836 = vmul.f32 %v818, %v831
  %v837 = vmul.f32 %v819, %v831
  %v838 = vmul.f32 %v820, %v831
  %v839 = vld [vmem:[%s7] sm:$0xff]
  %v840 = vld [vmem:[%s7 + $0x8] sm:$0xff]
  %842 = vset.pattern.permute.xlu0 0
  %843 = vperm.xlu0 %842, %v839
  %v844 = vpop.permute.xlu0 %843
  %847 = vset.pattern.permute.xlu0 0
  %848 = vperm.xlu0 %847, %v840
  %v849 = vpop.permute.xlu0 %848
  %v851 = vadd.f32 %v833, %v844
  %v852 = vadd.f32 %v834, %v844
  %v853 = vadd.f32 %v835, %v844
  %v854 = vadd.f32 %v836, %v849
  %v855 = vadd.f32 %v837, %v849
  %v856 = vadd.f32 %v838, %v849
  %v857 = vmax.f32 %v851, 0.0
  %v858 = vmax.f32 %v852, 0.0
  %v859 = vmax.f32 %v853, 0.0
  %v860 = vmax.f32 %v854, 0.0
  %v861 = vmax.f32 %v855, 0.0
  %v862 = vmax.f32 %v856, 0.0
  %863 = vst [vmem:[%s8] sm:$0xff] %v857
  %864 = vst [vmem:[%s8 + $0x8] sm:$0xff] %v858
  %865 = vst.msk [vmem:[%s8 + $0x10] sm:$0xff] %vm369, %v859
  %866 = vst [vmem:[%s8 + $0x18] sm:$0xff] %v860
  %867 = vst [vmem:[%s8 + $0x20] sm:$0xff] %v861
  %868 = vst.msk [vmem:[%s8 + $0x28] sm:$0xff] %vm369, %v862
  // Predicated region
  $region34: #{down_forward.1} parent=0 // pred_check
    _
  $region35: #{down_forward.1} parent=0 // pred_check_branch
    %870 = sbr.rel (0) target = $region37
  $region36: #{down_forward.1} parent=0 // pred_region
    _
  $region37: #{down_forward.1} parent=0 // pred_fallthru
    _
  // Predicated region
  $region38: #{down_forward.1} parent=0 // pred_check
    _
  $region39: #{down_forward.1} parent=0 // pred_check_branch
    %872 = sbr.rel (0) target = $region41
  $region40: #{down_forward.1} parent=0 // pred_region
    _
  $region41: #{down_forward.1} parent=0 // pred_fallthru
    _

</llo_original>
